<compile_context>
chip_gen: v6e
topology: v6e:2x2x1
jax: 0.10.0
libtpu: 0.0.40
codegen_flags: <defaults>
</compile_context>

<pallas_src>
import jax
import jax.numpy as jnp
from jax import lax
from jax.experimental import pallas as pl
from jax.experimental.pallas import tpu as pltpu

# Model hyperparameters (from the PyTorch script)
VOCAB_SIZE = 8
EMBEDDING_SIZE = 5
MAX_LEN = 4
HIDDEN_SIZE = VOCAB_SIZE            # 8
IN_DIM = EMBEDDING_SIZE * MAX_LEN   # 20

# TPU layout constants
LANE = 128                                   # lane width; feature dims padded to this
ONES_LANE_OH = MAX_LEN * VOCAB_SIZE          # 32: constant-1 lane in the one-hot (bias row)
ONES_LANE_H = HIDDEN_SIZE                    # 8 : constant-1 lane in h (bo row)
OH_W = ((MAX_LEN * VOCAB_SIZE + 1 + 7) // 8) * 8   # 40: one-hot width (32 + bias, 8-aligned)
SLAB_ROWS = OH_W + LANE                      # 168 (multiple of 8 -> clean sublane slices)
SLAB_COLS = 2 * LANE                         # 256: [inner-proj half | x-proj half]


def lm_kernel(ids_ref, slab_ref, out_ref):
    """Fully fused forward: gather + (x@Wi | x@Wx) + tanh + @Wo + add + softmax.

    ids_ref : [TB, MAX_LEN] int32   token ids (VMEM)
    slab_ref: [168, 256]    float32 packed parameters (single DMA, grid-resident)
        rows [0,32)   cols [0,8)    : blockdiag(emb) @ Wi
        row  32       cols [0,8)    : bi
        rows [0,32)   cols [128,136): blockdiag(emb) @ Wx
        row  32       cols [128,136): bx
        rows [40,48)  cols [0,8)    : Wo^T
        row  48       cols [0,8)    : bo
    out_ref : [TB, 128]     float32 softmax probs in lanes [0,8), zeros elsewhere
    """
    ids = ids_ref[...]                                   # [TB, MAX_LEN] int32
    tb = ids.shape[0]

    # ---- augmented one-hot [TB, OH_W] built on the VPU (replaces jnp.take) ----
    # lane t*8+v is 1 iff ids[:, t] == v; lane 32 is the constant-1 bias lane.
    col = lax.broadcasted_iota(jnp.int32, (tb, OH_W), 1)
    oh = jnp.where(col == ONES_LANE_OH, 1.0, 0.0).astype(jnp.float32)
    for t in range(MAX_LEN):                             # static unroll (4 iters)
        sel = ids[:, t:t + 1]                            # [TB, 1]
        oh = jnp.where(col == sel + t * VOCAB_SIZE, jnp.float32(1.0), oh)

    # ---- one MXU push: embedding gather + inner & x projections (+ biases) ----
    w_cat = slab_ref[0:OH_W, :]                          # [40, 256]
    pre = jnp.dot(oh, w_cat, preferred_element_type=jnp.float32)      # [TB, 256]

    h = jnp.tanh(pre[:, :LANE])                          # inner proj; pad lanes tanh(0)=0
    xp = pre[:, LANE:]                                   # x proj (+bx); pad lanes are 0

    # constant-1 lane so bo rides inside the Wo matmul (no bias broadcast)
    lane = lax.broadcasted_iota(jnp.int32, (tb, LANE), 1)
    h = jnp.where(lane == ONES_LANE_H, jnp.float32(1.0), h)

    w_o = slab_ref[OH_W:OH_W + LANE, 0:LANE]             # [128, 128]
    o = jnp.dot(h, w_o, preferred_element_type=jnp.float32)           # [TB, 128]

    y = xp + o                                           # valid in lanes [0, H)

    # ---- masked, numerically stable softmax over the H valid lanes ------------
    y = jnp.where(lane < HIDDEN_SIZE, y, -jnp.inf)
    y = y - jnp.max(y, axis=-1, keepdims=True)
    e = jnp.exp(y)                                       # pad lanes -> exp(-inf) = 0
    s = jnp.sum(e, axis=-1, keepdims=True)
    r = pl.reciprocal(s, approx=True)                    # EUP slot (idle after exp)
    r = r * (2.0 - s * r)                                # one NR step -> ~f32 accuracy
    out_ref[...] = e * r                                 # lane-dense [TB, 128] store


def language_model_forward(context, params):
    """context: int [B, MAX_LEN] token ids; returns float32 [B, VOCAB_SIZE]."""
    ids = context.astype(jnp.int32)
    b = ids.shape[0]

    # Batch tiling: single block for small B, otherwise 512-row parallel blocks.
    tb = b if b <= 512 else 512
    b_pad = ((b + tb - 1) // tb) * tb
    if b_pad != b:
        ids = jnp.pad(ids, ((0, b_pad - b), (0, 0)))

    out = pl.pallas_call(
        lm_kernel,
        out_shape=jax.ShapeDtypeStruct((b_pad, LANE), jnp.float32),
        grid_spec=pltpu.PrefetchScalarGridSpec(
            num_scalar_prefetch=0,
            grid=(b_pad // tb,),
            in_specs=[
                pl.BlockSpec((tb, MAX_LEN), lambda i: (i, 0)),            # token ids
                pl.BlockSpec((SLAB_ROWS, SLAB_COLS), lambda i: (0, 0)),   # weight slab (resident)
            ],
            out_specs=pl.BlockSpec((tb, LANE), lambda i: (i, 0)),
        ),
        compiler_params=pltpu.CompilerParams(
            dimension_semantics=("parallel",),   # megacore sharding on v7x; no-op on v5e/v6e
        ),
    )(ids, params["slab"])

    return out[:b, :VOCAB_SIZE]


def init_params(key):
    """Init matching the nn.Module, plus the packed/pre-fused parameter slab."""
    ks = jax.random.split(key, 7)
    h = HIDDEN_SIZE
    hp = jax.lax.Precision.HIGHEST

    def linear(kw, kb, fan_in, fan_out):
        # torch Linear stores weight as [out, in]; we keep it transposed [in, out]
        bound = 1.0 / jnp.sqrt(fan_in)
        w = jax.random.uniform(kw, (fan_out, fan_in), jnp.float32, -bound, bound)
        b = jax.random.uniform(kb, (fan_out,), jnp.float32, -bound, bound)
        return w.T, b

    embedding = jax.random.normal(ks[0], (VOCAB_SIZE, EMBEDDING_SIZE), jnp.float32)
    wi_t, bi = linear(ks[1], ks[2], IN_DIM, h)   # inner_projection_layer
    wo_t, bo = linear(ks[3], ks[4], h, h)        # outter_projection_layer
    wx_t, bx = linear(ks[5], ks[6], IN_DIM, h)   # x_projection_layer
    # TODO(synk): self.projection_layer is defined in __init__ but never used in forward(); omitted.

    # Fuse the embedding gather algebraically:  flatten(emb[ids]) == onehot(ids) @ blockdiag(emb)
    bd = jnp.zeros((MAX_LEN * VOCAB_SIZE, IN_DIM), jnp.float32)
    for t in range(MAX_LEN):
        bd = bd.at[t * VOCAB_SIZE:(t + 1) * VOCAB_SIZE,
                   t * EMBEDDING_SIZE:(t + 1) * EMBEDDING_SIZE].set(embedding)
    gi = jnp.dot(bd, wi_t, precision=hp)         # [32, H]  (embedding folded into Wi)
    gx = jnp.dot(bd, wx_t, precision=hp)         # [32, H]  (embedding folded into Wx)

    # One pre-padded slab -> one DMA; all sections start on 8-row / 128-lane boundaries.
    slab = jnp.zeros((SLAB_ROWS, SLAB_COLS), jnp.float32)
    slab = slab.at[0:MAX_LEN * VOCAB_SIZE, 0:h].set(gi)
    slab = slab.at[ONES_LANE_OH, 0:h].set(bi)                    # bias row (constant-1 lane)
    slab = slab.at[0:MAX_LEN * VOCAB_SIZE, LANE:LANE + h].set(gx)
    slab = slab.at[ONES_LANE_OH, LANE:LANE + h].set(bx)
    slab = slab.at[OH_W:OH_W + h, 0:h].set(wo_t)                 # Wo^T
    slab = slab.at[OH_W + ONES_LANE_H, 0:h].set(bo)              # bo row (constant-1 lane in h)

    raw = {"embedding": embedding, "wi_t": wi_t, "bi": bi,
           "wo_t": wo_t, "bo": bo, "wx_t": wx_t, "bx": bx}
    return {"slab": slab, "raw": raw}


def reference_forward(context, params):
    """Pure-JAX reference (un-fused math) for validation."""
    raw = params["raw"]
    hp = jax.lax.Precision.HIGHEST
    emb = jnp.take(raw["embedding"], context, axis=0)
    x = emb.reshape(context.shape[0], -1)
    h = jnp.tanh(jnp.dot(x, raw["wi_t"], precision=hp) + raw["bi"])
    o = jnp.dot(h, raw["wo_t"], precision=hp) + raw["bo"]
    xp = jnp.dot(x, raw["wx_t"], precision=hp) + raw["bx"]
    return jax.nn.softmax(xp + o, axis=-1)


if __name__ == "__main__":
    key = jax.random.PRNGKey(0)
    params = init_params(key)

    # batch=2, seq=max_len=4, token ids in [0, vocab_size)
    context = jnp.array([[1, 2, 3, 4],
                         [0, 5, 6, 7]], dtype=jnp.int32)

    y_pred = jax.block_until_ready(language_model_forward(context, params))
    y_ref = reference_forward(context, params)

    assert y_pred.shape == (2, VOCAB_SIZE)
    assert jnp.allclose(y_pred, y_ref, atol=5e-4, rtol=5e-4), (
        f"max abs err {float(jnp.max(jnp.abs(y_pred - y_ref)))}")
    # rows sum to 1 (softmax)
    assert jnp.allclose(jnp.sum(y_pred, axis=-1), jnp.ones(2), atol=5e-4)

    print("KERNEL_OK")
</pallas_src>

<mosaic_0001>
module attributes {stable_mosaic.version = 11 : i64} {
  func.func @lm_kernel(%arg0: i32, %arg1: memref<2x4xi32, #tpu.memory_space<vmem>>, %arg2: memref<168x256xf32, #tpu.memory_space<vmem>>, %arg3: memref<2x128xf32, #tpu.memory_space<vmem>>) attributes {dimension_semantics = [#tpu.dimension_semantics<parallel>], iteration_bounds = array<i64: 1>, scalar_prefetch = 0 : i64, scratch_operands = 0 : i64, tpu.core_type = #tpu.core_type<tc>, window_params = [{transform_indices = @transform_0, window_bounds = array<i64: 2, 4>}, {pipeline_mode = #tpu.pipeline_mode<synchronous>, transform_indices = @transform_1, window_bounds = array<i64: 168, 256>}, {transform_indices = @transform_2, window_bounds = array<i64: 2, 128>}]} {
    %c0 = arith.constant 0 : index
    %c0_0 = arith.constant 0 : index
    %0 = vector.load %arg1[%c0, %c0_0] : memref<2x4xi32, #tpu.memory_space<vmem>>, vector<2x4xi32>
    %1 = tpu.iota {dimensions = array<i32: 1>} : vector<2x40xi32>
    %c32_i32 = arith.constant 32 : i32
    %2 = vector.broadcast %c32_i32 : i32 to vector<2x40xi32>
    %3 = arith.cmpi eq, %1, %2 : vector<2x40xi32>
    %cst = arith.constant 1.000000e+00 : f32
    %cst_1 = arith.constant 0.000000e+00 : f32
    %4 = vector.broadcast %cst : f32 to vector<2x40xf32>
    %5 = vector.broadcast %cst_1 : f32 to vector<2x40xf32>
    %6 = arith.select %3, %4, %5 : vector<2x40xi1>, vector<2x40xf32>
    %7 = vector.extract_strided_slice %0 {offsets = [0, 0], sizes = [2, 1], strides = [1, 1]} : vector<2x4xi32> to vector<2x1xi32>
    %c0_i32 = arith.constant 0 : i32
    %8 = vector.broadcast %c0_i32 : i32 to vector<2x1xi32>
    %9 = arith.addi %7, %8 : vector<2x1xi32>
    %10 = vector.broadcast %9 : vector<2x1xi32> to vector<2x40xi32>
    %11 = arith.cmpi eq, %1, %10 : vector<2x40xi32>
    %cst_2 = arith.constant 1.000000e+00 : f32
    %12 = vector.broadcast %cst_2 : f32 to vector<2x40xf32>
    %13 = arith.select %11, %12, %6 : vector<2x40xi1>, vector<2x40xf32>
    %14 = vector.extract_strided_slice %0 {offsets = [0, 1], sizes = [2, 1], strides = [1, 1]} : vector<2x4xi32> to vector<2x1xi32>
    %c8_i32 = arith.constant 8 : i32
    %15 = vector.broadcast %c8_i32 : i32 to vector<2x1xi32>
    %16 = arith.addi %14, %15 : vector<2x1xi32>
    %17 = vector.broadcast %16 : vector<2x1xi32> to vector<2x40xi32>
    %18 = arith.cmpi eq, %1, %17 : vector<2x40xi32>
    %cst_3 = arith.constant 1.000000e+00 : f32
    %19 = vector.broadcast %cst_3 : f32 to vector<2x40xf32>
    %20 = arith.select %18, %19, %13 : vector<2x40xi1>, vector<2x40xf32>
    %21 = vector.extract_strided_slice %0 {offsets = [0, 2], sizes = [2, 1], strides = [1, 1]} : vector<2x4xi32> to vector<2x1xi32>
    %c16_i32 = arith.constant 16 : i32
    %22 = vector.broadcast %c16_i32 : i32 to vector<2x1xi32>
    %23 = arith.addi %21, %22 : vector<2x1xi32>
    %24 = vector.broadcast %23 : vector<2x1xi32> to vector<2x40xi32>
    %25 = arith.cmpi eq, %1, %24 : vector<2x40xi32>
    %cst_4 = arith.constant 1.000000e+00 : f32
    %26 = vector.broadcast %cst_4 : f32 to vector<2x40xf32>
    %27 = arith.select %25, %26, %20 : vector<2x40xi1>, vector<2x40xf32>
    %28 = vector.extract_strided_slice %0 {offsets = [0, 3], sizes = [2, 1], strides = [1, 1]} : vector<2x4xi32> to vector<2x1xi32>
    %c24_i32 = arith.constant 24 : i32
    %29 = vector.broadcast %c24_i32 : i32 to vector<2x1xi32>
    %30 = arith.addi %28, %29 : vector<2x1xi32>
    %31 = vector.broadcast %30 : vector<2x1xi32> to vector<2x40xi32>
    %32 = arith.cmpi eq, %1, %31 : vector<2x40xi32>
    %cst_5 = arith.constant 1.000000e+00 : f32
    %33 = vector.broadcast %cst_5 : f32 to vector<2x40xf32>
    %34 = arith.select %32, %33, %27 : vector<2x40xi1>, vector<2x40xf32>
    %c0_6 = arith.constant 0 : index
    %c0_7 = arith.constant 0 : index
    %35 = vector.load %arg2[%c0_6, %c0_7] : memref<168x256xf32, #tpu.memory_space<vmem>>, vector<40x256xf32>
    %cst_8 = arith.constant dense<0.000000e+00> : vector<2x256xf32>
    %36 = tpu.matmul %34, %35, %cst_8 {dimension_numbers = #tpu.dot_dimension_numbers<[1], [0], [0], [1], [0, 0, 1, 1], [], []>} : vector<2x40xf32>, vector<40x256xf32>, vector<2x256xf32> -> vector<2x256xf32>
    %37 = vector.extract_strided_slice %36 {offsets = [0, 0], sizes = [2, 128], strides = [1, 1]} : vector<2x256xf32> to vector<2x128xf32>
    %38 = math.tanh %37 : vector<2x128xf32>
    %39 = vector.extract_strided_slice %36 {offsets = [0, 128], sizes = [2, 128], strides = [1, 1]} : vector<2x256xf32> to vector<2x128xf32>
    %40 = tpu.iota {dimensions = array<i32: 1>} : vector<2x128xi32>
    %c8_i32_9 = arith.constant 8 : i32
    %41 = vector.broadcast %c8_i32_9 : i32 to vector<2x128xi32>
    %42 = arith.cmpi eq, %40, %41 : vector<2x128xi32>
    %cst_10 = arith.constant 1.000000e+00 : f32
    %43 = vector.broadcast %cst_10 : f32 to vector<2x128xf32>
    %44 = arith.select %42, %43, %38 : vector<2x128xi1>, vector<2x128xf32>
    %c40 = arith.constant 40 : index
    %c0_11 = arith.constant 0 : index
    %45 = vector.load %arg2[%c40, %c0_11] : memref<168x256xf32, #tpu.memory_space<vmem>>, vector<128x128xf32>
    %cst_12 = arith.constant dense<0.000000e+00> : vector<2x128xf32>
    %46 = tpu.matmul %44, %45, %cst_12 {dimension_numbers = #tpu.dot_dimension_numbers<[1], [0], [0], [1], [0, 0, 1, 1], [], []>} : vector<2x128xf32>, vector<128x128xf32>, vector<2x128xf32> -> vector<2x128xf32>
    %47 = arith.addf %39, %46 : vector<2x128xf32>
    %c8_i32_13 = arith.constant 8 : i32
    %48 = vector.broadcast %c8_i32_13 : i32 to vector<2x128xi32>
    %49 = arith.cmpi slt, %40, %48 : vector<2x128xi32>
    %cst_14 = arith.constant 0xFF800000 : f32
    %50 = vector.broadcast %cst_14 : f32 to vector<2x128xf32>
    %51 = arith.select %49, %47, %50 : vector<2x128xi1>, vector<2x128xf32>
    %cst_15 = arith.constant dense<0xFF800000> : vector<2xf32>
    %52 = vector.multi_reduction <maximumf>, %51, %cst_15 [1] : vector<2x128xf32> to vector<2xf32>
    %53 = vector.shape_cast %52 : vector<2xf32> to vector<2x1xf32>
    %54 = vector.broadcast %53 : vector<2x1xf32> to vector<2x128xf32>
    %55 = arith.subf %51, %54 : vector<2x128xf32>
    %56 = math.exp %55 : vector<2x128xf32>
    %cst_16 = arith.constant dense<0.000000e+00> : vector<2xf32>
    %57 = vector.multi_reduction <add>, %56, %cst_16 [1] : vector<2x128xf32> to vector<2xf32>
    %58 = vector.shape_cast %57 : vector<2xf32> to vector<2x1xf32>
    %59 = tpu.reciprocal %58 {approx = true} : vector<2x1xf32> -> vector<2x1xf32>
    %60 = arith.mulf %58, %59 : vector<2x1xf32>
    %cst_17 = arith.constant 2.000000e+00 : f32
    %61 = vector.broadcast %cst_17 : f32 to vector<2x1xf32>
    %62 = arith.subf %61, %60 : vector<2x1xf32>
    %63 = arith.mulf %59, %62 : vector<2x1xf32>
    %64 = vector.broadcast %63 : vector<2x1xf32> to vector<2x128xf32>
    %65 = arith.mulf %56, %64 : vector<2x128xf32>
    %c0_18 = arith.constant 0 : index
    %c0_19 = arith.constant 0 : index
    %66 = vector.load %arg3[%c0_18, %c0_19] : memref<2x128xf32, #tpu.memory_space<vmem>>, vector<2x128xf32>
    tpu.vector_store %arg3[%c0_18, %c0_19], %65 {strides = array<i32>} : memref<2x128xf32, #tpu.memory_space<vmem>>, vector<2x128xf32>,
    return
  }
  func.func @transform_0(%arg0: i32) -> (i32, i32) {
    %c0_i32 = arith.constant 0 : i32
    %c0_i32_0 = arith.constant 0 : i32
    return %arg0, %c0_i32 : i32, i32
  }
  func.func @transform_1(%arg0: i32) -> (i32, i32) {
    %c0_i32 = arith.constant 0 : i32
    %c0_i32_0 = arith.constant 0 : i32
    %c0_i32_1 = arith.constant 0 : i32
    return %c0_i32, %c0_i32_0 : i32, i32
  }
  func.func @transform_2(%arg0: i32) -> (i32, i32) {
    %c0_i32 = arith.constant 0 : i32
    %c0_i32_0 = arith.constant 0 : i32
    return %arg0, %c0_i32 : i32, i32
  }
}

</mosaic_0001>

<llo_original>
// kernel: tpu_custom_call.1
$region0: #{tpu_custom_call.1}
  #allocation0 [shape = 'u32[]', space=smem, size = 0x4, offset = 0x4, fixed_abs, tag = 'smem constant byte address 0x4 - core index']
  #allocation1 [shape = 'u32[144,128]{1,0:T(1,128)}', space=vmem, size = 0x12000, scoped, tag = 'internal scratch']
  %s0 = inlined_call_operand.hbm [shape: s32[2,4], index: 0, kind: input, shape index: {}]
  %s1 = inlined_call_operand.hbm [shape: f32[168,256], index: 1, kind: input, shape index: {}]
  %s2 = inlined_call_operand.hbm [shape: f32[2,128], index: 2, kind: output, shape index: {}]
  %s3 = sld [smem:[#allocation0]]
  $region26: #{tpu_custom_call.1} parent=0
    _
  %s5 = ssub.s32 1, %s3
  %s6 = scalar_select 0, %s5, %s3
  $region1: #{tpu_custom_call.1} parent=0
    #allocation2 [shape = 'u8[1024]{0}', space=vmem, size = 0x400, scoped, tag = 'input window, operand 0, single buffered']
    #allocation3 [shape = 's32[1]{0}', space=sflag, size = 0x4, scoped, tag = 'scoped memory for tpu_custom_call.1']
    #allocation4 [shape = 's32[1]{0}', space=sflag, size = 0x4, scoped, tag = 'scoped memory for tpu_custom_call.1']
    #allocation5 [shape = 'u8[172032]{0}', space=vmem, size = 0x2a000, scoped, tag = 'input window, operand 1, single buffered']
    #allocation6 [shape = 's32[1]{0}', space=sflag, size = 0x4, scoped, tag = 'scoped memory for tpu_custom_call.1']
    #allocation7 [shape = 'u8[1024]{0}', space=vmem, size = 0x400, scoped, tag = 'output window, operand 0, single buffered']
    %7 = vsyncpa [#allocation3], 0
    %8 = vsyncpa [#allocation6], 0
    %9 = vsyncpa [#allocation4], 0
    // Predicated region
    $region2: #{tpu_custom_call.1} parent=1 // pred_check
      _
    $region3: #{tpu_custom_call.1} parent=1 // pred_check_branch
      %11 = sbr.rel (0) target = $region5
    $region4: #{tpu_custom_call.1} parent=1 // pred_region
      %s13 = ssub.s32 32, 32
      %14 = vsyncadd [#allocation3], %s13
      %s16 = sshll.u32 [#allocation2], 4
      %s17 = int_to_ptr.vmem [resolvable:$true] %s16
      %19 = dma.hbm_to_vmem [thread:$0]  %s0, 32, %s17, [#allocation3]
    $region5: #{tpu_custom_call.1} parent=1 // pred_fallthru
      _
    // Predicated region
    $region6: #{tpu_custom_call.1} parent=1 // pred_check
      _
    $region7: #{tpu_custom_call.1} parent=1 // pred_check_branch
      %21 = sbr.rel (0) target = $region9
    $region8: #{tpu_custom_call.1} parent=1 // pred_region
      %s23 = ssub.s32 5376, 5376
      %24 = vsyncadd [#allocation6], %s23
      %s25 = sshll.u32 [#allocation5], 4
      %s26 = int_to_ptr.vmem [resolvable:$true] %s25
      %31 = dma.hbm_to_vmem [thread:$0]  %s1, 5376, %s26, [#allocation6], 256, 256, 16
    $region9: #{tpu_custom_call.1} parent=1 // pred_fallthru
      _
    // Predicated region
    $region10: #{tpu_custom_call.1} parent=1 // pred_check
      _
    $region11: #{tpu_custom_call.1} parent=1 // pred_check_branch
      %33 = sbr.rel (0) target = $region13
    $region12: #{tpu_custom_call.1} parent=1 // pred_region
      %34 = dma.done [#allocation3], 32
    $region13: #{tpu_custom_call.1} parent=1 // pred_fallthru
      _
    // Predicated region
    $region14: #{tpu_custom_call.1} parent=1 // pred_check
      _
    $region15: #{tpu_custom_call.1} parent=1 // pred_check_branch
      %36 = sbr.rel (0) target = $region17
    $region16: #{tpu_custom_call.1} parent=1 // pred_region
      %37 = dma.done [#allocation6], 5376
    $region17: #{tpu_custom_call.1} parent=1 // pred_fallthru
      _
    %v38 = vld [vmem:[#allocation2] sm:$0x3]
    %v39 = vlaneseq
    %v40 = vand.u32 %v39, 127
    %vm41 = vcmp.eq.s32.totalorder %v40, 32
    %v42 = vsel %vm41, 1.0, 0.0
    %43 = vset.pattern.permute.xlu0 0
    %44 = vperm.xlu0 %43, %v38
    %v45 = vpop.permute.xlu0 %44
    %vm46 = vcmp.eq.s32.totalorder %v40, %v45
    %v47 = vsel %vm46, 1.0, %v42
    %v48 = vadd.s32 %v38, 8
    %49 = vset.pattern.permute.xlu0 1
    %50 = vperm.xlu0 %49, %v48
    %v51 = vpop.permute.xlu0 %50
    %vm52 = vcmp.eq.s32.totalorder %v40, %v51
    %v53 = vsel %vm52, 1.0, %v47
    %v54 = vadd.s32 %v38, 16
    %55 = vset.pattern.permute.xlu0 2
    %56 = vperm.xlu0 %55, %v54
    %v57 = vpop.permute.xlu0 %56
    %vm58 = vcmp.eq.s32.totalorder %v40, %v57
    %v59 = vsel %vm58, 1.0, %v53
    %v60 = vadd.s32 %v38, 24
    %61 = vset.pattern.permute.xlu0 3
    %62 = vperm.xlu0 %61, %v60
    %v63 = vpop.permute.xlu0 %62
    %vm64 = vcmp.eq.s32.totalorder %v40, %v63
    %v65 = vsel %vm64, 1.0, %v59
    %v66 = vld [vmem:[#allocation5] sm:$0xff]
    %v67 = vld [vmem:[#allocation5 + $0x8] sm:$0xff]
    %v68 = vld [vmem:[#allocation5 + $0x10] sm:$0xff]
    %v69 = vld [vmem:[#allocation5 + $0x18] sm:$0xff]
    %v70 = vld [vmem:[#allocation5 + $0x20] sm:$0xff]
    %v71 = vld [vmem:[#allocation5 + $0x28] sm:$0xff]
    %v72 = vld [vmem:[#allocation5 + $0x30] sm:$0xff]
    %v73 = vld [vmem:[#allocation5 + $0x38] sm:$0xff]
    %v74 = vld [vmem:[#allocation5 + $0x40] sm:$0xff]
    %v75 = vld [vmem:[#allocation5 + $0x48] sm:$0xff]
    %vm76 = vcmask 326656
    %v78 = vsel %vm76, %v65, 0
    %80 = vmatprep.subr.mxu0 0.0
    %81 = vmatpush1.msra.mxu0 0.0
    %82 = vmatprep.subr.mxu0 0.0
    %83 = vmatpush1.msra.mxu0 0.0
    %84 = vmatprep.subr.mxu0 0.0
    %85 = vmatpush1.msra.mxu0 0.0
    %86 = vmatprep.subr.mxu0 0.0
    %87 = vmatpush1.msra.mxu0 0.0
    %88 = vmatprep.subr.mxu0 0.0
    %89 = vmatpush1.msra.mxu0 0.0
    %90 = vmatprep.subr.mxu0 0.0
    %91 = vmatpush1.msra.mxu0 0.0
    %92 = vmatprep.subr.mxu0 0.0
    %93 = vmatpush1.msra.mxu0 0.0
    %94 = vmatprep.subr.mxu0 0.0
    %95 = vmatpush1.msra.mxu0 0.0
    %96 = vmatprep.subr.mxu0 0.0
    %97 = vmatpush1.msra.mxu0 0.0
    %98 = vmatprep.subr.mxu0 0.0
    %99 = vmatpush1.msra.mxu0 0.0
    %100 = vmatprep.subr.mxu0 0.0
    %101 = vmatpush1.msra.mxu0 0.0
    %102 = vmatprep.subr.mxu0 %v75
    %103 = vmatpush1.msra.mxu0 %v74
    %104 = vmatprep.subr.mxu0 %v73
    %105 = vmatpush1.msra.mxu0 %v72
    %106 = vmatprep.subr.mxu0 %v71
    %107 = vmatpush1.msra.mxu0 %v70
    %108 = vmatprep.subr.mxu0 %v69
    %109 = vmatpush1.msra.mxu0 %v68
    %110 = vmatprep.subr.mxu0 %v67
    %111 = vmatpush1.msra.mxu0 %v66
    %112 = vmatprep.subr.mxu0 0.0
    %113 = vmatpush2.msra.mxu0 0.0
    %114 = vmatprep.subr.mxu0 0.0
    %115 = vmatpush2.msra.mxu0 0.0
    %116 = vmatprep.subr.mxu0 0.0
    %117 = vmatpush2.msra.mxu0 0.0
    %118 = vmatprep.subr.mxu0 0.0
    %119 = vmatpush2.msra.mxu0 0.0
    %120 = vmatprep.subr.mxu0 0.0
    %121 = vmatpush2.msra.mxu0 0.0
    %122 = vmatprep.subr.mxu0 0.0
    %123 = vmatpush2.msra.mxu0 0.0
    %124 = vmatprep.subr.mxu0 0.0
    %125 = vmatpush2.msra.mxu0 0.0
    %126 = vmatprep.subr.mxu0 0.0
    %127 = vmatpush2.msra.mxu0 0.0
    %128 = vmatprep.subr.mxu0 0.0
    %129 = vmatpush2.msra.mxu0 0.0
    %130 = vmatprep.subr.mxu0 0.0
    %131 = vmatpush2.msra.mxu0 0.0
    %132 = vmatprep.subr.mxu0 0.0
    %133 = vmatpush2.msra.mxu0 0.0
    %134 = vmatprep.subr.mxu0 0.0
    %135 = vmatpush2.msra.mxu0 0.0
    %136 = vmatprep.subr.mxu0 0.0
    %137 = vmatpush2.msra.mxu0 0.0
    %138 = vmatprep.subr.mxu0 0.0
    %139 = vmatpush2.msra.mxu0 0.0
    %140 = vmatprep.subr.mxu0 0.0
    %141 = vmatpush2.msra.mxu0 0.0
    %142 = vmatprep.subr.mxu0 0.0
    %143 = vmatpush2.msra.mxu0 0.0
    %144 = vmatprep.mubr.f32.mxu0 0.0
    %145 = vmatmul.mubr.f32.gmra.mxu0 %v78
    %v146 = vpop.f32.mrf.mxu0
    %v147 = vadd.f32 0.0, %v146
    %v148 = vpop.f32.mrf.mxu0
    %v149 = vadd.f32 0.0, %v148
    %150 = vdwg.mxu0
    %v151 = vtanh.pop %v147
    %vm152 = vcmp.eq.s32.totalorder %v40, 8
    %v153 = vsel %vm152, 1.0, %v151
    %v154 = vld [vmem:[#allocation5 + $0x50] sm:$0xff]
    %v155 = vld [vmem:[#allocation5 + $0x60] sm:$0xff]
    %v156 = vld [vmem:[#allocation5 + $0x70] sm:$0xff]
    %v157 = vld [vmem:[#allocation5 + $0x80] sm:$0xff]
    %v158 = vld [vmem:[#allocation5 + $0x90] sm:$0xff]
    %v159 = vld [vmem:[#allocation5 + $0xa0] sm:$0xff]
    %v160 = vld [vmem:[#allocation5 + $0xb0] sm:$0xff]
    %v161 = vld [vmem:[#allocation5 + $0xc0] sm:$0xff]
    %v162 = vld [vmem:[#allocation5 + $0xd0] sm:$0xff]
    %v163 = vld [vmem:[#allocation5 + $0xe0] sm:$0xff]
    %v164 = vld [vmem:[#allocation5 + $0xf0] sm:$0xff]
    %v165 = vld [vmem:[#allocation5 + $0x100] sm:$0xff]
    %v166 = vld [vmem:[#allocation5 + $0x110] sm:$0xff]
    %v167 = vld [vmem:[#allocation5 + $0x120] sm:$0xff]
    %v168 = vld [vmem:[#allocation5 + $0x130] sm:$0xff]
    %v169 = vld [vmem:[#allocation5 + $0x140] sm:$0xff]
    %170 = vmatprep.subr.mxu0 0.0
    %171 = vmatpush1.msra.mxu0 %v169
    %172 = vmatprep.subr.mxu0 0.0
    %173 = vmatpush1.msra.mxu0 %v168
    %174 = vmatprep.subr.mxu0 0.0
    %175 = vmatpush1.msra.mxu0 %v167
    %176 = vmatprep.subr.mxu0 0.0
    %177 = vmatpush1.msra.mxu0 %v166
    %178 = vmatprep.subr.mxu0 0.0
    %179 = vmatpush1.msra.mxu0 %v165
    %180 = vmatprep.subr.mxu0 0.0
    %181 = vmatpush1.msra.mxu0 %v164
    %182 = vmatprep.subr.mxu0 0.0
    %183 = vmatpush1.msra.mxu0 %v163
    %184 = vmatprep.subr.mxu0 0.0
    %185 = vmatpush1.msra.mxu0 %v162
    %186 = vmatprep.subr.mxu0 0.0
    %187 = vmatpush1.msra.mxu0 %v161
    %188 = vmatprep.subr.mxu0 0.0
    %189 = vmatpush1.msra.mxu0 %v160
    %190 = vmatprep.subr.mxu0 0.0
    %191 = vmatpush1.msra.mxu0 %v159
    %192 = vmatprep.subr.mxu0 0.0
    %193 = vmatpush1.msra.mxu0 %v158
    %194 = vmatprep.subr.mxu0 0.0
    %195 = vmatpush1.msra.mxu0 %v157
    %196 = vmatprep.subr.mxu0 0.0
    %197 = vmatpush1.msra.mxu0 %v156
    %198 = vmatprep.subr.mxu0 0.0
    %199 = vmatpush1.msra.mxu0 %v155
    %200 = vmatprep.subr.mxu0 0.0
    %201 = vmatpush1.msra.mxu0 %v154
    %202 = vmatprep.subr.mxu0 0.0
    %203 = vmatpush2.msra.mxu0 0.0
    %204 = vmatprep.subr.mxu0 0.0
    %205 = vmatpush2.msra.mxu0 0.0
    %206 = vmatprep.subr.mxu0 0.0
    %207 = vmatpush2.msra.mxu0 0.0
    %208 = vmatprep.subr.mxu0 0.0
    %209 = vmatpush2.msra.mxu0 0.0
    %210 = vmatprep.subr.mxu0 0.0
    %211 = vmatpush2.msra.mxu0 0.0
    %212 = vmatprep.subr.mxu0 0.0
    %213 = vmatpush2.msra.mxu0 0.0
    %214 = vmatprep.subr.mxu0 0.0
    %215 = vmatpush2.msra.mxu0 0.0
    %216 = vmatprep.subr.mxu0 0.0
    %217 = vmatpush2.msra.mxu0 0.0
    %218 = vmatprep.subr.mxu0 0.0
    %219 = vmatpush2.msra.mxu0 0.0
    %220 = vmatprep.subr.mxu0 0.0
    %221 = vmatpush2.msra.mxu0 0.0
    %222 = vmatprep.subr.mxu0 0.0
    %223 = vmatpush2.msra.mxu0 0.0
    %224 = vmatprep.subr.mxu0 0.0
    %225 = vmatpush2.msra.mxu0 0.0
    %226 = vmatprep.subr.mxu0 0.0
    %227 = vmatpush2.msra.mxu0 0.0
    %228 = vmatprep.subr.mxu0 0.0
    %229 = vmatpush2.msra.mxu0 0.0
    %230 = vmatprep.subr.mxu0 0.0
    %231 = vmatpush2.msra.mxu0 0.0
    %232 = vmatprep.subr.mxu0 0.0
    %233 = vmatpush2.msra.mxu0 0.0
    %234 = vmatprep.mubr.f32.mxu0 0.0
    %235 = vmatmul.mubr.f32.gmra.mxu0 %v153
    %v236 = vpop.f32.mrf.mxu0
    %v237 = vadd.f32 0.0, %v236
    %v238 = vpop.f32.mrf.mxu0
    %239 = vdwg.mxu0
    %v240 = vadd.f32 %v149, %v237
    %vm241 = vcmp.lt.s32.totalorder %v40, 8
    %v242 = vsel %vm241, %v240, -inf
    %vm243 = vcmask 1041408
    %v244 = vsel %vm243, %v242, -inf
    %245 = vmax.xlane.f32.xlu0 %v244
    %v246 = vpop.xlane.xlu0 %245
    %v247 = vsub.f32 %v242, %v246
    %v248 = vmul.f32 %v247, 1.442695
    %v249 = vpow.pop %v248
    %v250 = vsel %vm243, %v249, 0.0
    %251 = vadd.xlane.f32.xlu0 %v250
    %v252 = vpop.xlane.xlu0 %251
    %v253 = vrcp.pop %v252
    %v254 = vmul.f32 %v252, %v253
    %v255 = vsub.f32 2.0, %v254
    %v256 = vmul.f32 %v253, %v255
    %v257 = vmul.f32 %v249, %v256
    %258 = vst [vmem:[#allocation7] sm:$0x3] %v257
    // Predicated region
    $region18: #{tpu_custom_call.1} parent=1 // pred_check
      _
    $region19: #{tpu_custom_call.1} parent=1 // pred_check_branch
      %260 = sbr.rel (0) target = $region21
    $region20: #{tpu_custom_call.1} parent=1 // pred_region
      %s262 = ssub.s32 32, 32
      %263 = vsyncadd [#allocation4], %s262
      %s265 = sshll.u32 [#allocation7], 4
      %s266 = int_to_ptr.vmem [resolvable:$true] %s265
      %268 = dma.vmem_to_hbm [thread:$0]  %s266, 32, %s2, [#allocation4]
    $region21: #{tpu_custom_call.1} parent=1 // pred_fallthru
      _
    // Predicated region
    $region22: #{tpu_custom_call.1} parent=1 // pred_check
      _
    $region23: #{tpu_custom_call.1} parent=1 // pred_check_branch
      %270 = sbr.rel (0) target = $region25
    $region24: #{tpu_custom_call.1} parent=1 // pred_region
      %271 = dma.done [#allocation4], 32
    $region25: #{tpu_custom_call.1} parent=1 // pred_fallthru
      _
    %272 = vsyncpa [#allocation3], 1
    %273 = vsyncpa [#allocation6], 1
    %274 = vsyncpa [#allocation4], 1

</llo_original>
